<compile_context>
chip_gen: v7x
topology: tpu7x:2x2x1
jax: 0.10.0
libtpu: 0.0.40
codegen_flags: <defaults>
</compile_context>

<pallas_src>
import numpy as np
import jax
import jax.numpy as jnp
from jax.experimental import pallas as pl
from jax.experimental.pallas import tpu as pltpu
from jax.scipy.special import erf as _jerf

TWOPI = 2.0 * np.pi


def _round_up(x, m):
    return ((x + m - 1) // m) * m


def _cdiv(a, b):
    return (a + b - 1) // b


def _choose_k_tile(k_max, tk_max=1024):
    """Lane tiling for k-vectors: lane-dense, and >= 2 tiles whenever K > 128 so the 'parallel'
    k axis can split across the two TensorCores of a v7x chip (review item 1)."""
    kp128 = _round_up(max(k_max, 1), 128)
    if kp128 <= 128:
        tk = 128
    else:
        tk = min(tk_max, _round_up(_cdiv(kp128, 2), 128))
    kp = _round_up(kp128, tk)
    return tk, kp


def _choose_atom_tile(n_max, tnp_max=128):
    """Sublane tiling for atoms: tnp <= 128 bounds every (tnp, tk) elementwise temporary to
    <= 512 KiB, keeping the whole chain comfortably inside scoped VMEM on v5e (review item 6)."""
    if n_max <= tnp_max:
        tnp = max(8, _round_up(n_max, 8))
        np_pad = tnp
    else:
        tnp = tnp_max
        np_pad = _round_up(n_max, tnp)
    return tnp, np_pad


# ----------------------------- Pallas kernel --------------------------------
def ewald_kspace_kernel(rq_ref, nT_ref, coef_ref, out_ref, sc_ref, ss_ref):
    # grid = (systems b ["parallel"], k lane tiles ki ["parallel"], atom tiles ai ["arbitrary"]).
    ai = pl.program_id(2)

    @pl.when(ai == 0)
    def _():
        sc_ref[...] = jnp.zeros_like(sc_ref)
        ss_ref[...] = jnp.zeros_like(ss_ref)

    rq = rq_ref[0]                       # (tnp, 8): cols 0..2 = fractional coords s, col 3 = q
    nT = nT_ref[0]                       # (8, tk) : rows 0..2 = integer n-vectors (as f32)

    s1 = rq[:, 0:1]
    s2 = rq[:, 1:2]
    s3 = rq[:, 2:3]
    qv = rq[:, 3:4]                      # zero for padded atoms
    n1 = nT[0:1, :]
    n2 = nT[1:2, :]
    n3 = nT[2:3, :]

    # phase in "turns": k.r = 2*pi * (n . s).  Exact f32 VPU FMAs; |t| stays O(|n|) so the
    # absolute f32 phase error is ~1e-6 turns regardless of cell / position magnitude.
    t = s1 * n1 + s2 * n2 + s3 * n3                          # (tnp, tk)

    # --- shared range reduction + polynomial sincos (one reduction feeds BOTH cos and sin) ---
    t = t - jnp.floor(t + 0.5)                               # mod 1  -> [-0.5, 0.5]
    qd = jnp.floor(4.0 * t + 0.5)                            # quadrant in {-2,-1,0,1,2}
    x = (t - 0.25 * qd) * TWOPI                              # [-pi/4, pi/4]
    x2 = x * x
    # f32-accurate Taylor/Horner on [-pi/4, pi/4] (truncation error < 3e-8)
    c0 = 1.0 + x2 * (-0.5 + x2 * (1.0 / 24.0 + x2 * (-1.0 / 720.0 + x2 * (1.0 / 40320.0))))
    s0 = x * (1.0 + x2 * (-1.0 / 6.0 + x2 * (1.0 / 120.0
                          + x2 * (-1.0 / 5040.0 + x2 * (1.0 / 362880.0)))))
    cq = 1.0 - jnp.abs(qd)                                   # cos(pi/2 * qd) in {-1, 0, 1}
    sq = qd * (1.0 - jnp.abs(cq))                            # sin(pi/2 * qd) in {-1, 0, 1}
    cos_kr = c0 * cq - s0 * sq
    sin_kr = s0 * cq + c0 * sq

    # q-weighted partial reduction (tnp, tk) -> (8, tk): cross-vreg VALU adds + unmasked
    # accumulator stores; the sublane (XLU) reduce and masked (1, tk) store are deferred
    # to the last atom step (review item 10).
    tnp = rq.shape[0]
    qc = (qv * cos_kr).reshape(tnp // 8, 8, -1)
    qs = (qv * sin_kr).reshape(tnp // 8, 8, -1)
    sc_ref[...] += jnp.sum(qc, axis=0)
    ss_ref[...] += jnp.sum(qs, axis=0)

    @pl.when(ai == pl.num_programs(2) - 1)
    def _():
        sc = jnp.sum(sc_ref[...], axis=0, keepdims=True)     # (1, tk)  Re S(k)
        ss = jnp.sum(ss_ref[...], axis=0, keepdims=True)     # (1, tk)  Im S(k)
        # per-lane contribution; the tiny cross-lane reduce to a scalar happens outside
        out_ref[0] = coef_ref[0] * (sc * sc + ss * ss)


def kspace_sum_batched(rq_np, nT_np, coef_np, tnp, tk):
    """sum_k coef_k * |S(k)|^2 per system, S(k) = sum_i q_i exp(2*pi*i n.s_i), for a whole
    batch of systems in a single pallas_call."""
    B, Np, _ = rq_np.shape
    Kp = nT_np.shape[-1]
    nk = Kp // tk
    na = Np // tnp

    # right-sized VMEM limit (review item 7): live (tnp, tk) temporaries + double-buffered
    # I/O tiles + the two (8, tk) accumulators, with 2x headroom, clamped to [24, 48] MiB.
    tmp_bytes = 12 * tnp * tk * 4
    io_bytes = 2 * 4 * (tnp * 8 + 8 * tk + 2 * tk)
    scr_bytes = 2 * 8 * tk * 4
    vmem_limit = int(min(48 << 20, max(24 << 20, 2 * (tmp_bytes + io_bytes + scr_bytes))))

    out = pl.pallas_call(
        ewald_kspace_kernel,
        out_shape=jax.ShapeDtypeStruct((B, 1, Kp), jnp.float32),
        grid_spec=pltpu.PrefetchScalarGridSpec(
            num_scalar_prefetch=0,
            grid=(B, nk, na),
            in_specs=[
                pl.BlockSpec((1, tnp, 8), lambda b, ki, ai: (b, ai, 0)),   # fused (s | q) slab
                pl.BlockSpec((1, 8, tk), lambda b, ki, ai: (b, 0, ki)),    # integer n-vectors
                pl.BlockSpec((1, 1, tk), lambda b, ki, ai: (b, 0, ki)),    # k coefficients
            ],
            out_specs=pl.BlockSpec((1, 1, tk), lambda b, ki, ai: (b, 0, ki)),
            scratch_shapes=[
                pltpu.VMEM((8, tk), jnp.float32),   # Re S(k) accumulator
                pltpu.VMEM((8, tk), jnp.float32),   # Im S(k) accumulator
            ],
        ),
        compiler_params=pltpu.CompilerParams(
            dimension_semantics=("parallel", "parallel", "arbitrary"),
            vmem_limit_bytes=vmem_limit,
        ),
    )(jnp.asarray(rq_np), jnp.asarray(nT_np), jnp.asarray(coef_np))

    # TODO(synk): promote to f64 / pairwise for very large K (review correctness concern 3).
    return jnp.sum(out, axis=(1, 2))     # (B,) -- one tiny cross-lane reduce outside the kernel


# ------------------------------ Ewald module ---------------------------------
class EwaldPallas:
    def __init__(self, dl=2.0, sigma=1.0, remove_self_interaction=False):
        self.dl = dl
        self.sigma = sigma
        self.sigma_sq_half = sigma ** 2 / 2.0
        self.twopi = TWOPI
        self.remove_self_interaction = remove_self_interaction
        self.norm_factor = 90.0474
        self.k_sq_max = (self.twopi / self.dl) ** 2

    def __call__(self, q, r, cell, batch=None):
        q = np.asarray(q, np.float64)
        r = np.asarray(r, np.float64)
        if q.ndim == 1:
            q = q[:, None]
        n, d = r.shape
        assert d == 3, "r dimension error"
        assert n == q.shape[0], "q dimension error"
        if batch is None:
            batch = np.zeros(n, np.int64)
        batch = np.asarray(batch)
        uniq = np.unique(batch)

        results = [None] * len(uniq)
        tri_pos, tri_items = [], []
        for pos, i in enumerate(uniq):
            mask = batch == i
            r_now, q_now = r[mask], q[mask]
            box = None
            if cell is not None:
                box = np.asarray(cell[int(i)], np.float64)
            if box is None or np.linalg.det(box) < 1e-6:
                results[pos] = self.compute_potential_realspace(r_now, q_now)
            else:
                tri_pos.append(pos)
                tri_items.append(self._prepare_triclinic(r_now, q_now, box))

        if tri_items:
            pots = self._kspace_batched(tri_items)       # (n_tri,) -- one fused TPU call
            for j, pos in enumerate(tri_pos):
                results[pos] = pots[j][None]
        return jnp.stack(results, axis=0).sum(axis=1)

    # ----- host-side k-vector enumeration (data-dependent shapes: mask compaction) -----
    def _prepare_triclinic(self, r_now, q_now, box):
        cell_inv = np.linalg.inv(box)
        G = 2.0 * np.pi * cell_inv.T
        norms = np.linalg.norm(box, axis=1)
        Nk = [max(1, int(nn / self.dl)) for nn in norms]
        n1 = np.arange(-Nk[0], Nk[0] + 1)
        n2 = np.arange(-Nk[1], Nk[1] + 1)
        n3 = np.arange(-Nk[2], Nk[2] + 1)
        nvec = np.stack(np.meshgrid(n1, n2, n3, indexing="ij"),
                        axis=-1).reshape(-1, 3).astype(np.float64)
        kvec = nvec @ G
        k_sq = np.sum(kvec ** 2, axis=1)
        mask = (k_sq > 0) & (k_sq <= self.k_sq_max)
        kvec, k_sq, nvec = kvec[mask], k_sq[mask], nvec[mask]
        non_zero = (nvec != 0).astype(np.int64)
        first_non_zero = np.argmax(non_zero, axis=1)
        sign = np.take_along_axis(nvec, first_non_zero[:, None], axis=1).squeeze(-1)
        hemisphere_mask = (sign > 0) | np.all(nvec == 0, axis=1)
        nvec, k_sq = nvec[hemisphere_mask], k_sq[hemisphere_mask]
        factors = np.where(np.all(nvec == 0, axis=1), 1.0, 2.0)
        coef = factors * np.exp(-self.sigma_sq_half * k_sq) / k_sq

        # fractional coordinates ("turns" formulation): k.r = 2*pi * n . s with s = r @ cell_inv,
        # wrapped to [0,1) so f32 phase accuracy is independent of |r| / cell size.
        s = r_now @ cell_inv
        s = s - np.floor(s)

        return dict(
            s=np.asarray(s, np.float32),
            q=np.asarray(q_now, np.float64).reshape(-1).astype(np.float32),
            nvec=np.asarray(nvec, np.float32),
            coef=np.asarray(coef, np.float32),
            volume=float(np.linalg.det(box)),
            q_sq_sum=float(np.sum(np.asarray(q_now, np.float64) ** 2)),
        )

    # ----- hot path: one batched Pallas call for every triclinic system in the batch -----
    def _kspace_batched(self, items):
        B = len(items)
        n_max = max(it["s"].shape[0] for it in items)
        k_max = max(it["coef"].shape[0] for it in items)
        tk, Kp = _choose_k_tile(k_max)
        tnp, Np = _choose_atom_tile(n_max)

        rq = np.zeros((B, Np, 8), np.float32)      # fused (s | q) slab; padded rows have q = 0
        nT = np.zeros((B, 8, Kp), np.float32)      # n-vectors; padded lanes have coef = 0
        coef = np.zeros((B, 1, Kp), np.float32)
        for b, it in enumerate(items):
            n = it["s"].shape[0]
            K = it["coef"].shape[0]
            rq[b, :n, :3] = it["s"]
            rq[b, :n, 3] = it["q"]
            if K > 0:
                nT[b, :3, :K] = it["nvec"].T
                coef[b, 0, :K] = it["coef"]

        ksum = kspace_sum_batched(rq, nT, coef, tnp, tk)                 # (B,)
        vols = jnp.asarray([it["volume"] for it in items], jnp.float32)
        pot = ksum / vols
        if self.remove_self_interaction:
            selfs = jnp.asarray([it["q_sq_sum"] for it in items], jnp.float32)
            pot = pot - selfs / jnp.float32(self.sigma * (2.0 * np.pi) ** 1.5)
        return pot * jnp.float32(self.norm_factor)

    def compute_potential_realspace(self, r_raw, q):
        # TODO(synk): realspace erf pairwise branch kept in plain JAX (not exercised by the
        # triclinic demo; erf lowering inside a Pallas TPU kernel is unverified here).
        r_raw = jnp.asarray(r_raw, jnp.float32)
        q = jnp.asarray(q, jnp.float32)
        r_ij = r_raw[None, :, :] - r_raw[:, None, :]
        r_ij_norm = jnp.linalg.norm(r_ij, axis=-1)
        conv = _jerf(r_ij_norm / self.sigma / np.sqrt(2.0))
        r_p = 1.0 / (r_ij_norm + 1e-6)
        if q.ndim == 1:
            q = q[:, None]
        pot = jnp.sum(q[None] * q[:, None] * r_p[..., None] * conv[..., None]).reshape(-1)
        pot = pot / self.twopi / 2.0
        if not self.remove_self_interaction:
            pot = pot + jnp.sum(q ** 2) / (self.sigma * self.twopi ** 1.5)
        return pot * self.norm_factor


# ----------------------- pure-numpy float64 reference ------------------------
def ewald_reference(q, r, cell, batch, dl=2.0, sigma=1.0, remove_self_interaction=False):
    norm_factor = 90.0474
    k_sq_max = (TWOPI / dl) ** 2
    if q.ndim == 1:
        q = q[:, None]
    results = []
    for i in np.unique(batch):
        m = batch == i
        r_now, q_now = r[m], q[m]
        box = cell[int(i)]
        assert np.linalg.det(box) >= 1e-6
        cell_inv = np.linalg.inv(box)
        G = 2.0 * np.pi * cell_inv.T
        norms = np.linalg.norm(box, axis=1)
        Nk = [max(1, int(nn / dl)) for nn in norms]
        nvec = np.stack(np.meshgrid(np.arange(-Nk[0], Nk[0] + 1),
                                    np.arange(-Nk[1], Nk[1] + 1),
                                    np.arange(-Nk[2], Nk[2] + 1), indexing="ij"),
                        axis=-1).reshape(-1, 3).astype(np.float64)
        kvec = nvec @ G
        k_sq = (kvec ** 2).sum(1)
        msk = (k_sq > 0) & (k_sq <= k_sq_max)
        kvec, k_sq, nvec = kvec[msk], k_sq[msk], nvec[msk]
        fz = np.argmax((nvec != 0).astype(int), axis=1)
        sign = np.take_along_axis(nvec, fz[:, None], 1).squeeze(-1)
        hm = (sign > 0) | np.all(nvec == 0, axis=1)
        kvec, k_sq = kvec[hm], k_sq[hm]
        factors = np.where(np.all(nvec[hm] == 0, axis=1), 1.0, 2.0)
        kdr = r_now @ kvec.T
        Sk = (q_now * np.exp(1j * kdr)).sum(0)
        kfac = np.exp(-(sigma ** 2 / 2.0) * k_sq) / k_sq
        pot = (factors * kfac * np.abs(Sk) ** 2).sum() / np.linalg.det(box)
        if remove_self_interaction:
            pot -= (q_now ** 2).sum() / (sigma * (2.0 * np.pi) ** 1.5)
        results.append(np.array([pot * norm_factor]))
    return np.stack(results, axis=0).sum(axis=1)


# ---------------------------------- demo --------------------------------------
if __name__ == "__main__":
    key = jax.random.PRNGKey(0)
    k1, k2 = jax.random.split(key)

    n_per, B = 6, 2
    n = n_per * B
    r = jax.random.uniform(k1, (n, 3), minval=0.0, maxval=5.0, dtype=jnp.float32)
    q = jax.random.normal(k2, (n,), dtype=jnp.float32)
    batch = np.array([0] * n_per + [1] * n_per, dtype=np.int64)
    cell = np.array(
        [[[6.0, 0.0, 0.0], [0.3, 6.2, 0.0], [0.1, 0.2, 5.8]],
         [[5.5, 0.0, 0.0], [0.0, 6.1, 0.2], [0.0, 0.0, 6.3]]], dtype=np.float32)

    ewald = EwaldPallas(dl=2.0, sigma=1.0, remove_self_interaction=False)
    out = ewald(np.asarray(q), np.asarray(r), cell, batch)
    out = jax.block_until_ready(out)

    ref = ewald_reference(np.asarray(q, np.float64), np.asarray(r, np.float64),
                          np.asarray(cell, np.float64), batch,
                          dl=2.0, sigma=1.0, remove_self_interaction=False)
    np.testing.assert_allclose(np.asarray(out, np.float64), ref, rtol=1e-3, atol=1e-4)
    print("KERNEL_OK")
</pallas_src>

<mosaic_0001>
module attributes {stable_mosaic.version = 11 : i64} {
  func.func @ewald_kspace_kernel(%arg0: i32, %arg1: i32, %arg2: i32, %arg3: memref<1x8x8xf32, #tpu.memory_space<vmem>>, %arg4: memref<1x8x128xf32, #tpu.memory_space<vmem>>, %arg5: memref<1x1x128xf32, #tpu.memory_space<vmem>>, %arg6: memref<1x1x128xf32, #tpu.memory_space<vmem>>, %arg7: memref<8x128xf32, #tpu.memory_space<vmem>>, %arg8: memref<8x128xf32, #tpu.memory_space<vmem>>) attributes {dimension_semantics = [#tpu.dimension_semantics<parallel>, #tpu.dimension_semantics<parallel>, #tpu.dimension_semantics<arbitrary>], iteration_bounds = array<i64: 2, 1, 1>, scalar_prefetch = 0 : i64, scratch_operands = 2 : i64, tpu.core_type = #tpu.core_type<tc>, window_params = [{transform_indices = @transform_0, window_bounds = array<i64: 1, 8, 8>}, {transform_indices = @transform_1, window_bounds = array<i64: 1, 8, 128>}, {transform_indices = @transform_2, window_bounds = array<i64: 1, 1, 128>}, {transform_indices = @transform_3, window_bounds = array<i64: 1, 1, 128>}]} {
    %c0_i32 = arith.constant 0 : i32
    %0 = arith.cmpi eq, %arg2, %c0_i32 : i32
    %1 = arith.extui %0 : i1 to i32
    %c0_i32_0 = arith.constant 0 : i32
    %2 = arith.cmpi ne, %1, %c0_i32_0 : i32
    scf.if %2 {
      %cst_34 = arith.constant 0.000000e+00 : f32
      %97 = vector.broadcast %cst_34 : f32 to vector<8x128xf32>
      %c0_35 = arith.constant 0 : index
      %c0_36 = arith.constant 0 : index
      %98 = vector.load %arg7[%c0_35, %c0_36] : memref<8x128xf32, #tpu.memory_space<vmem>>, vector<8x128xf32>
      tpu.vector_store %arg7[%c0_35, %c0_36], %97 {strides = array<i32>} : memref<8x128xf32, #tpu.memory_space<vmem>>, vector<8x128xf32>,
      %cst_37 = arith.constant 0.000000e+00 : f32
      %99 = vector.broadcast %cst_37 : f32 to vector<8x128xf32>
      %c0_38 = arith.constant 0 : index
      %c0_39 = arith.constant 0 : index
      %100 = vector.load %arg8[%c0_38, %c0_39] : memref<8x128xf32, #tpu.memory_space<vmem>>, vector<8x128xf32>
      tpu.vector_store %arg8[%c0_38, %c0_39], %99 {strides = array<i32>} : memref<8x128xf32, #tpu.memory_space<vmem>>, vector<8x128xf32>,
    } else {
    }
    %c0 = arith.constant 0 : index
    %c0_1 = arith.constant 0 : index
    %c0_2 = arith.constant 0 : index
    %3 = vector.load %arg3[%c0, %c0_1, %c0_2] : memref<1x8x8xf32, #tpu.memory_space<vmem>>, vector<1x8x8xf32>
    %4 = vector.shape_cast %3 : vector<1x8x8xf32> to vector<8x8xf32>
    %c0_3 = arith.constant 0 : index
    %c0_4 = arith.constant 0 : index
    %c0_5 = arith.constant 0 : index
    %5 = vector.load %arg4[%c0_3, %c0_4, %c0_5] : memref<1x8x128xf32, #tpu.memory_space<vmem>>, vector<1x8x128xf32>
    %6 = vector.shape_cast %5 : vector<1x8x128xf32> to vector<8x128xf32>
    %7 = vector.extract_strided_slice %4 {offsets = [0, 0], sizes = [8, 1], strides = [1, 1]} : vector<8x8xf32> to vector<8x1xf32>
    %8 = vector.extract_strided_slice %4 {offsets = [0, 1], sizes = [8, 1], strides = [1, 1]} : vector<8x8xf32> to vector<8x1xf32>
    %9 = vector.extract_strided_slice %4 {offsets = [0, 2], sizes = [8, 1], strides = [1, 1]} : vector<8x8xf32> to vector<8x1xf32>
    %10 = vector.extract_strided_slice %4 {offsets = [0, 3], sizes = [8, 1], strides = [1, 1]} : vector<8x8xf32> to vector<8x1xf32>
    %11 = vector.extract_strided_slice %6 {offsets = [0, 0], sizes = [1, 128], strides = [1, 1]} : vector<8x128xf32> to vector<1x128xf32>
    %12 = vector.extract_strided_slice %6 {offsets = [1, 0], sizes = [1, 128], strides = [1, 1]} : vector<8x128xf32> to vector<1x128xf32>
    %13 = vector.extract_strided_slice %6 {offsets = [2, 0], sizes = [1, 128], strides = [1, 1]} : vector<8x128xf32> to vector<1x128xf32>
    %14 = vector.broadcast %7 : vector<8x1xf32> to vector<8x128xf32>
    %15 = vector.broadcast %11 : vector<1x128xf32> to vector<8x128xf32>
    %16 = arith.mulf %14, %15 : vector<8x128xf32>
    %17 = vector.broadcast %8 : vector<8x1xf32> to vector<8x128xf32>
    %18 = vector.broadcast %12 : vector<1x128xf32> to vector<8x128xf32>
    %19 = arith.mulf %17, %18 : vector<8x128xf32>
    %20 = arith.addf %16, %19 : vector<8x128xf32>
    %21 = vector.broadcast %9 : vector<8x1xf32> to vector<8x128xf32>
    %22 = vector.broadcast %13 : vector<1x128xf32> to vector<8x128xf32>
    %23 = arith.mulf %21, %22 : vector<8x128xf32>
    %24 = arith.addf %20, %23 : vector<8x128xf32>
    %cst = arith.constant 5.000000e-01 : f32
    %25 = vector.broadcast %cst : f32 to vector<8x128xf32>
    %26 = arith.addf %24, %25 : vector<8x128xf32>
    %27 = math.floor %26 : vector<8x128xf32>
    %28 = arith.subf %24, %27 : vector<8x128xf32>
    %cst_6 = arith.constant 4.000000e+00 : f32
    %29 = vector.broadcast %cst_6 : f32 to vector<8x128xf32>
    %30 = arith.mulf %29, %28 : vector<8x128xf32>
    %cst_7 = arith.constant 5.000000e-01 : f32
    %31 = vector.broadcast %cst_7 : f32 to vector<8x128xf32>
    %32 = arith.addf %30, %31 : vector<8x128xf32>
    %33 = math.floor %32 : vector<8x128xf32>
    %cst_8 = arith.constant 2.500000e-01 : f32
    %34 = vector.broadcast %cst_8 : f32 to vector<8x128xf32>
    %35 = arith.mulf %34, %33 : vector<8x128xf32>
    %36 = arith.subf %28, %35 : vector<8x128xf32>
    %cst_9 = arith.constant 6.28318548 : f32
    %37 = vector.broadcast %cst_9 : f32 to vector<8x128xf32>
    %38 = arith.mulf %36, %37 : vector<8x128xf32>
    %39 = arith.mulf %38, %38 : vector<8x128xf32>
    %cst_10 = arith.constant 2.48015876E-5 : f32
    %40 = vector.broadcast %cst_10 : f32 to vector<8x128xf32>
    %41 = arith.mulf %39, %40 : vector<8x128xf32>
    %cst_11 = arith.constant -0.00138888892 : f32
    %42 = vector.broadcast %cst_11 : f32 to vector<8x128xf32>
    %43 = arith.addf %42, %41 : vector<8x128xf32>
    %44 = arith.mulf %39, %43 : vector<8x128xf32>
    %cst_12 = arith.constant 0.0416666679 : f32
    %45 = vector.broadcast %cst_12 : f32 to vector<8x128xf32>
    %46 = arith.addf %45, %44 : vector<8x128xf32>
    %47 = arith.mulf %39, %46 : vector<8x128xf32>
    %cst_13 = arith.constant -5.000000e-01 : f32
    %48 = vector.broadcast %cst_13 : f32 to vector<8x128xf32>
    %49 = arith.addf %48, %47 : vector<8x128xf32>
    %50 = arith.mulf %39, %49 : vector<8x128xf32>
    %cst_14 = arith.constant 1.000000e+00 : f32
    %51 = vector.broadcast %cst_14 : f32 to vector<8x128xf32>
    %52 = arith.addf %51, %50 : vector<8x128xf32>
    %cst_15 = arith.constant 2.75573188E-6 : f32
    %53 = vector.broadcast %cst_15 : f32 to vector<8x128xf32>
    %54 = arith.mulf %39, %53 : vector<8x128xf32>
    %cst_16 = arith.constant -1.98412701E-4 : f32
    %55 = vector.broadcast %cst_16 : f32 to vector<8x128xf32>
    %56 = arith.addf %55, %54 : vector<8x128xf32>
    %57 = arith.mulf %39, %56 : vector<8x128xf32>
    %cst_17 = arith.constant 0.00833333377 : f32
    %58 = vector.broadcast %cst_17 : f32 to vector<8x128xf32>
    %59 = arith.addf %58, %57 : vector<8x128xf32>
    %60 = arith.mulf %39, %59 : vector<8x128xf32>
    %cst_18 = arith.constant -0.166666672 : f32
    %61 = vector.broadcast %cst_18 : f32 to vector<8x128xf32>
    %62 = arith.addf %61, %60 : vector<8x128xf32>
    %63 = arith.mulf %39, %62 : vector<8x128xf32>
    %cst_19 = arith.constant 1.000000e+00 : f32
    %64 = vector.broadcast %cst_19 : f32 to vector<8x128xf32>
    %65 = arith.addf %64, %63 : vector<8x128xf32>
    %66 = arith.mulf %38, %65 : vector<8x128xf32>
    %67 = math.absf %33 : vector<8x128xf32>
    %cst_20 = arith.constant 1.000000e+00 : f32
    %68 = vector.broadcast %cst_20 : f32 to vector<8x128xf32>
    %69 = arith.subf %68, %67 : vector<8x128xf32>
    %70 = math.absf %69 : vector<8x128xf32>
    %cst_21 = arith.constant 1.000000e+00 : f32
    %71 = vector.broadcast %cst_21 : f32 to vector<8x128xf32>
    %72 = arith.subf %71, %70 : vector<8x128xf32>
    %73 = arith.mulf %33, %72 : vector<8x128xf32>
    %74 = arith.mulf %52, %69 : vector<8x128xf32>
    %75 = arith.mulf %66, %73 : vector<8x128xf32>
    %76 = arith.subf %74, %75 : vector<8x128xf32>
    %77 = arith.mulf %66, %69 : vector<8x128xf32>
    %78 = arith.mulf %52, %73 : vector<8x128xf32>
    %79 = arith.addf %77, %78 : vector<8x128xf32>
    %80 = vector.broadcast %10 : vector<8x1xf32> to vector<8x128xf32>
    %81 = arith.mulf %80, %76 : vector<8x128xf32>
    %82 = vector.shape_cast %81 : vector<8x128xf32> to vector<1x8x128xf32>
    %83 = vector.broadcast %10 : vector<8x1xf32> to vector<8x128xf32>
    %84 = arith.mulf %83, %79 : vector<8x128xf32>
    %85 = vector.shape_cast %84 : vector<8x128xf32> to vector<1x8x128xf32>
    %c0_22 = arith.constant 0 : index
    %c0_23 = arith.constant 0 : index
    %86 = vector.load %arg7[%c0_22, %c0_23] : memref<8x128xf32, #tpu.memory_space<vmem>>, vector<8x128xf32>
    %cst_24 = arith.constant dense<0.000000e+00> : vector<8x128xf32>
    %87 = vector.multi_reduction <add>, %82, %cst_24 [0] : vector<1x8x128xf32> to vector<8x128xf32>
    %88 = arith.addf %86, %87 : vector<8x128xf32>
    %c0_25 = arith.constant 0 : index
    %c0_26 = arith.constant 0 : index
    %89 = vector.load %arg7[%c0_25, %c0_26] : memref<8x128xf32, #tpu.memory_space<vmem>>, vector<8x128xf32>
    tpu.vector_store %arg7[%c0_25, %c0_26], %88 {strides = array<i32>} : memref<8x128xf32, #tpu.memory_space<vmem>>, vector<8x128xf32>,
    %c0_27 = arith.constant 0 : index
    %c0_28 = arith.constant 0 : index
    %90 = vector.load %arg8[%c0_27, %c0_28] : memref<8x128xf32, #tpu.memory_space<vmem>>, vector<8x128xf32>
    %cst_29 = arith.constant dense<0.000000e+00> : vector<8x128xf32>
    %91 = vector.multi_reduction <add>, %85, %cst_29 [0] : vector<1x8x128xf32> to vector<8x128xf32>
    %92 = arith.addf %90, %91 : vector<8x128xf32>
    %c0_30 = arith.constant 0 : index
    %c0_31 = arith.constant 0 : index
    %93 = vector.load %arg8[%c0_30, %c0_31] : memref<8x128xf32, #tpu.memory_space<vmem>>, vector<8x128xf32>
    tpu.vector_store %arg8[%c0_30, %c0_31], %92 {strides = array<i32>} : memref<8x128xf32, #tpu.memory_space<vmem>>, vector<8x128xf32>,
    %c0_i32_32 = arith.constant 0 : i32
    %94 = arith.cmpi eq, %arg2, %c0_i32_32 : i32
    %95 = arith.extui %94 : i1 to i32
    %c0_i32_33 = arith.constant 0 : i32
    %96 = arith.cmpi ne, %95, %c0_i32_33 : i32
    scf.if %96 {
      %c0_34 = arith.constant 0 : index
      %c0_35 = arith.constant 0 : index
      %97 = vector.load %arg7[%c0_34, %c0_35] : memref<8x128xf32, #tpu.memory_space<vmem>>, vector<8x128xf32>
      %cst_36 = arith.constant dense<0.000000e+00> : vector<128xf32>
      %98 = vector.multi_reduction <add>, %97, %cst_36 [0] : vector<8x128xf32> to vector<128xf32>
      %99 = vector.shape_cast %98 : vector<128xf32> to vector<1x128xf32>
      %c0_37 = arith.constant 0 : index
      %c0_38 = arith.constant 0 : index
      %100 = vector.load %arg8[%c0_37, %c0_38] : memref<8x128xf32, #tpu.memory_space<vmem>>, vector<8x128xf32>
      %cst_39 = arith.constant dense<0.000000e+00> : vector<128xf32>
      %101 = vector.multi_reduction <add>, %100, %cst_39 [0] : vector<8x128xf32> to vector<128xf32>
      %102 = vector.shape_cast %101 : vector<128xf32> to vector<1x128xf32>
      %c0_40 = arith.constant 0 : index
      %c0_41 = arith.constant 0 : index
      %c0_42 = arith.constant 0 : index
      %103 = vector.load %arg5[%c0_40, %c0_41, %c0_42] : memref<1x1x128xf32, #tpu.memory_space<vmem>>, vector<1x1x128xf32>
      %104 = vector.shape_cast %103 : vector<1x1x128xf32> to vector<1x128xf32>
      %105 = arith.mulf %99, %99 : vector<1x128xf32>
      %106 = arith.mulf %102, %102 : vector<1x128xf32>
      %107 = arith.addf %105, %106 : vector<1x128xf32>
      %108 = arith.mulf %104, %107 : vector<1x128xf32>
      %c0_43 = arith.constant 0 : index
      %c0_44 = arith.constant 0 : index
      %c0_45 = arith.constant 0 : index
      %109 = vector.load %arg6[%c0_43, %c0_44, %c0_45] : memref<1x1x128xf32, #tpu.memory_space<vmem>>, vector<1x1x128xf32>
      %110 = vector.shape_cast %109 : vector<1x1x128xf32> to vector<1x128xf32>
      %111 = vector.shape_cast %108 : vector<1x128xf32> to vector<1x1x128xf32>
      tpu.vector_store %arg6[%c0_43, %c0_44, %c0_45], %111 {strides = array<i32>} : memref<1x1x128xf32, #tpu.memory_space<vmem>>, vector<1x1x128xf32>,
    } else {
    }
    return
  }
  func.func @transform_0(%arg0: i32, %arg1: i32, %arg2: i32) -> (i32, i32, i32) {
    %c0_i32 = arith.constant 0 : i32
    %c0_i32_0 = arith.constant 0 : i32
    return %arg0, %arg2, %c0_i32 : i32, i32, i32
  }
  func.func @transform_1(%arg0: i32, %arg1: i32, %arg2: i32) -> (i32, i32, i32) {
    %c0_i32 = arith.constant 0 : i32
    %c0_i32_0 = arith.constant 0 : i32
    return %arg0, %c0_i32, %arg1 : i32, i32, i32
  }
  func.func @transform_2(%arg0: i32, %arg1: i32, %arg2: i32) -> (i32, i32, i32) {
    %c0_i32 = arith.constant 0 : i32
    %c0_i32_0 = arith.constant 0 : i32
    return %arg0, %c0_i32, %arg1 : i32, i32, i32
  }
  func.func @transform_3(%arg0: i32, %arg1: i32, %arg2: i32) -> (i32, i32, i32) {
    %c0_i32 = arith.constant 0 : i32
    %c0_i32_0 = arith.constant 0 : i32
    return %arg0, %c0_i32, %arg1 : i32, i32, i32
  }
}

</mosaic_0001>

<llo_original>
// kernel: tpu_custom_call.1
$region0: #{tpu_custom_call.1}
  #allocation0 [shape = 'u32[]', space=smem, size = 0x4, offset = 0x4, fixed_abs, tag = 'smem constant byte address 0x4 - core index']
  #allocation1 [shape = 'u32[144,128]{1,0:T(1,128)}', space=vmem, size = 0x12000, scoped, tag = 'internal scratch']
  #allocation2 [shape = 'f32[8,128]{1,0:T(8,128)}', space=vmem, size = 0x1000, scoped, tag = 'scratch operand']
  #allocation3 [shape = 'f32[8,128]{1,0:T(8,128)}', space=vmem, size = 0x1000, scoped, tag = 'scratch operand']
  %s0 = inlined_call_operand.hbm [shape: f32[2,8,8], index: 0, kind: input, shape index: {}]
  %s1 = inlined_call_operand.hbm [shape: f32[2,8,128], index: 1, kind: input, shape index: {}]
  %s2 = inlined_call_operand.vmem [shape: f32[2,1,128], index: 2, kind: input, shape index: {}]
  %s3 = inlined_call_operand.hbm [shape: f32[2,1,128], index: 3, kind: output, shape index: {}]
  %s4 = sld [smem:[#allocation0]]
  $region61: #{tpu_custom_call.1} parent=0
    _
  %s6 = ssub.s32 1, %s4
  %s7 = scalar_select 0, %s6, %s4
  $region1: #{tpu_custom_call.1} parent=0
    #allocation4 [shape = 'u8[8192]{0}', space=vmem, size = 0x2000, scoped, tag = 'input window, operand 0']
    #allocation5 [shape = 's32[2]{0}', space=sflag, size = 0x8, scoped, tag = 'scoped memory for tpu_custom_call.1']
    #allocation6 [shape = 's32[2]{0}', space=sflag, size = 0x8, scoped, tag = 'scoped memory for tpu_custom_call.1']
    #allocation7 [shape = 'u8[8192]{0}', space=vmem, size = 0x2000, scoped, tag = 'input window, operand 1']
    #allocation8 [shape = 's32[2]{0}', space=sflag, size = 0x8, scoped, tag = 'scoped memory for tpu_custom_call.1']
    #allocation9 [shape = 'u8[1024]{0}', space=vmem, size = 0x400, scoped, tag = 'output window, operand 0']
    %8 = vsyncpa [#allocation5], 0
    %s9 = scalar_lea.sflag [#allocation5], 1
    %10 = vsyncpa %s9, 0
    %11 = vsyncpa [#allocation8], 0
    %s12 = scalar_lea.sflag [#allocation8], 1
    %13 = vsyncpa %s12, 0
    %14 = vsyncpa [#allocation6], 0
    %s15 = scalar_lea.sflag [#allocation6], 1
    %16 = vsyncpa %s15, 0
    loop: start=0, step=1, limit=4
    $region2: #{tpu_custom_call.1} parent=1 // loop_pre_header
      _
    $region3: #{tpu_custom_call.1} parent=1 // loop_header
      %s18 = sphi 0, %s22
      %p19 = scmp.ge.s32.totalorder %s18, 4
      %s25 = sphi 0, %s44
      %s26 = sphi 0, %s40
      %s27 = sphi 0, %s36
      %s28 = sphi 0, %s25
      %s29 = sphi 0, %s26
      %s30 = sphi 0, %s27
      %s31 = sphi 0, %s28
      %s32 = sphi 0, %s29
      %s33 = sphi 0, %s30
      %s49 = sphi 0, %s51
      %s52 = sphi 0, %s49
      %s53 = sphi 0, %s52
      %s69 = sphi 0, %s53
      %s77 = sphi 0, %s79
      %s80 = sphi 0, %s77
      %s81 = sphi 0, %s80
      %s97 = sphi 0, %s81
      %s105 = sphi 0, %s107
      %s108 = sphi 0, %s105
      %s109 = sphi 0, %s108
      %s125 = sphi 0, %s109
      %s133 = sphi 0, %s135
      %s136 = sphi 0, %s133
      %s137 = sphi 0, %s136
      %s153 = sphi 0, %s137
    $region4: #{tpu_custom_call.1} parent=1 // loop_header_branch
      %21 = sbr.rel (%p19) target = $region8
    $region5: #{tpu_custom_call.1} parent=1 // loop_body
      %s23 = ssub.s32 %s18, 1
      %s24 = ssub.s32 %s18, 2
      %s34 = sadd.s32 1, %s27
      %p35 = scmp.ge.s32.totalorder %s34, 1
      %s36 = scalar_select %p35, 0, %s34
      %s37 = sadd.s32 1, %s26
      %s38 = scalar_select %p35, %s37, %s26
      %p39 = scmp.ge.s32.totalorder %s38, 1
      %s40 = scalar_select %p39, 0, %s38
      %s41 = sadd.s32 1, %s25
      %s42 = scalar_select %p39, %s41, %s25
      %p43 = scmp.ge.s32.totalorder %s42, 2
      %s44 = scalar_select %p43, 0, %s42
      %s45 = ssub.s32 %s25, %s44
      %s46 = ssub.s32 %s27, %s36
      %s47 = sor.u32 %s45, %s46
      %p48 = scmp.eq.s32.totalorder %s47, 0
      %s50 = sadd.s32 %s49, 1
      %s51 = scalar_select %p48, %s49, %s50
      %p54 = pneg %p48
      %p55 = scmp.eq.s32.totalorder %s18, 1
      %p56 = por %p54, %p55
      %p57 = scmp.ne.s32.totalorder %s49, %s52
      %p58 = scmp.eq.s32.totalorder %s18, 0
      %p59 = por %p57, %p58
      %p60 = scmp.ne.s32.totalorder %s49, %s52
      %p61 = scmp.eq.s32.totalorder %s23, 1
      %p62 = por %p60, %p61
      %p63 = scmp.ne.s32.totalorder %s52, %s53
      %p64 = scmp.eq.s32.totalorder %s23, 0
      %p65 = por %p63, %p64
      %p66 = scmp.ne.s32.totalorder %s52, %s53
      %p67 = scmp.eq.s32.totalorder %s24, 1
      %p68 = por %p66, %p67
      %p70 = scmp.ne.s32.totalorder %s53, %s69
      %p71 = scmp.eq.s32.totalorder %s24, 0
      %p72 = por %p70, %p71
      %s73 = ssub.s32 %s25, %s44
      %s74 = ssub.s32 %s26, %s40
      %s75 = sor.u32 %s73, %s74
      %p76 = scmp.eq.s32.totalorder %s75, 0
      %s78 = sadd.s32 %s77, 1
      %s79 = scalar_select %p76, %s77, %s78
      %p82 = pneg %p76
      %p83 = scmp.eq.s32.totalorder %s18, 1
      %p84 = por %p82, %p83
      %p85 = scmp.ne.s32.totalorder %s77, %s80
      %p86 = scmp.eq.s32.totalorder %s18, 0
      %p87 = por %p85, %p86
      %p88 = scmp.ne.s32.totalorder %s77, %s80
      %p89 = scmp.eq.s32.totalorder %s23, 1
      %p90 = por %p88, %p89
      %p91 = scmp.ne.s32.totalorder %s80, %s81
      %p92 = scmp.eq.s32.totalorder %s23, 0
      %p93 = por %p91, %p92
      %p94 = scmp.ne.s32.totalorder %s80, %s81
      %p95 = scmp.eq.s32.totalorder %s24, 1
      %p96 = por %p94, %p95
      %p98 = scmp.ne.s32.totalorder %s81, %s97
      %p99 = scmp.eq.s32.totalorder %s24, 0
      %p100 = por %p98, %p99
      %s101 = ssub.s32 %s25, %s44
      %s102 = ssub.s32 %s26, %s40
      %s103 = sor.u32 %s101, %s102
      %p104 = scmp.eq.s32.totalorder %s103, 0
      %s106 = sadd.s32 %s105, 1
      %s107 = scalar_select %p104, %s105, %s106
      %p110 = pneg %p104
      %p111 = scmp.eq.s32.totalorder %s18, 1
      %p112 = por %p110, %p111
      %p113 = scmp.ne.s32.totalorder %s105, %s108
      %p114 = scmp.eq.s32.totalorder %s18, 0
      %p115 = por %p113, %p114
      %p116 = scmp.ne.s32.totalorder %s105, %s108
      %p117 = scmp.eq.s32.totalorder %s23, 1
      %p118 = por %p116, %p117
      %p119 = scmp.ne.s32.totalorder %s108, %s109
      %p120 = scmp.eq.s32.totalorder %s23, 0
      %p121 = por %p119, %p120
      %p122 = scmp.ne.s32.totalorder %s108, %s109
      %p123 = scmp.eq.s32.totalorder %s24, 1
      %p124 = por %p122, %p123
      %p126 = scmp.ne.s32.totalorder %s109, %s125
      %p127 = scmp.eq.s32.totalorder %s24, 0
      %p128 = por %p126, %p127
      %s129 = ssub.s32 %s25, %s44
      %s130 = ssub.s32 %s26, %s40
      %s131 = sor.u32 %s129, %s130
      %p132 = scmp.eq.s32.totalorder %s131, 0
      %s134 = sadd.s32 %s133, 1
      %s135 = scalar_select %p132, %s133, %s134
      %p138 = pneg %p132
      %p139 = scmp.eq.s32.totalorder %s18, 1
      %p140 = por %p138, %p139
      %p141 = scmp.ne.s32.totalorder %s133, %s136
      %p142 = scmp.eq.s32.totalorder %s18, 0
      %p143 = por %p141, %p142
      %p144 = scmp.ne.s32.totalorder %s133, %s136
      %p145 = scmp.eq.s32.totalorder %s23, 1
      %p146 = por %p144, %p145
      %p147 = scmp.ne.s32.totalorder %s136, %s137
      %p148 = scmp.eq.s32.totalorder %s23, 0
      %p149 = por %p147, %p148
      %p150 = scmp.ne.s32.totalorder %s136, %s137
      %p151 = scmp.eq.s32.totalorder %s24, 1
      %p152 = por %p150, %p151
      %p154 = scmp.ne.s32.totalorder %s137, %s153
      %p155 = scmp.eq.s32.totalorder %s24, 0
      %p156 = por %p154, %p155
      %p157 = scmp.le.s32.totalorder 1, %s18
      %p158 = scmp.lt.s32.totalorder %s18, 3
      %p159 = pnand %p157, %p158
      %p160 = pneg %p159
      // Predicated region
      $region9: #{tpu_custom_call.1} parent=5 // pred_check
        _
      $region10: #{tpu_custom_call.1} parent=5 // pred_check_branch
        %162 = sbr.rel (%p159) target = $region12
      $region11: #{tpu_custom_call.1} parent=5 // pred_region
        %s163 = ssub.s32 %s18, 1
      $region12: #{tpu_custom_call.1} parent=5 // pred_fallthru
        _
      %p164 = scmp.lt.s32.totalorder %s18, 2
      // Predicated region
      $region13: #{tpu_custom_call.1} parent=5 // pred_check
        %p165 = pneg %p164
      $region14: #{tpu_custom_call.1} parent=5 // pred_check_branch
        %167 = sbr.rel (%p165) target = $region16
      $region15: #{tpu_custom_call.1} parent=5 // pred_region
        // Predicated region
        $region17: #{tpu_custom_call.1} parent=15 // pred_check
          %p168 = pneg %p59
        $region18: #{tpu_custom_call.1} parent=15 // pred_check_branch
          %170 = sbr.rel (%p168) target = $region20
        $region19: #{tpu_custom_call.1} parent=15 // pred_region
          %s171 = sand.u32 %s49, 1
          %s172 = scalar_lea.sflag [#allocation5], %s171
          %s173 = sand.u32 %s49, 1
          %s174 = smul.addr %s173, 8
          %s175 = scalar_lea.vmem [#allocation4], %s174
          %s177 = ssub.s32 128, 128
          %178 = vsyncadd %s172, %s177
          %s179 = sadd.s32 %s27, %s25
          %s180 = smul.addr %s179, 128
          %s181 = scalar_lea.hbm %s0, %s180
          %s183 = sshll.u32 %s175, 4
          %s184 = int_to_ptr.vmem [resolvable:$true] %s183
          %186 = dma.hbm_to_vmem [thread:$0]  %s181, 128, %s184, %s172
        $region20: #{tpu_custom_call.1} parent=15 // pred_fallthru
          _
        // Predicated region
        $region21: #{tpu_custom_call.1} parent=15 // pred_check
          %p187 = pneg %p87
        $region22: #{tpu_custom_call.1} parent=15 // pred_check_branch
          %189 = sbr.rel (%p187) target = $region24
        $region23: #{tpu_custom_call.1} parent=15 // pred_region
          %s190 = sand.u32 %s77, 1
          %s191 = scalar_lea.sflag [#allocation8], %s190
          %s192 = sand.u32 %s77, 1
          %s193 = smul.addr %s192, 8
          %s194 = scalar_lea.vmem [#allocation7], %s193
          %s196 = ssub.s32 128, 128
          %197 = vsyncadd %s191, %s196
          %s198 = sadd.s32 %s26, %s25
          %s199 = smul.addr %s198, 128
          %s200 = scalar_lea.hbm %s1, %s199
          %s202 = sshll.u32 %s194, 4
          %s203 = int_to_ptr.vmem [resolvable:$true] %s202
          %205 = dma.hbm_to_vmem [thread:$0]  %s200, 128, %s203, %s191
        $region24: #{tpu_custom_call.1} parent=15 // pred_fallthru
          _
        // Predicated region
        $region25: #{tpu_custom_call.1} parent=15 // pred_check
          %p206 = pneg %p115
        $region26: #{tpu_custom_call.1} parent=15 // pred_check_branch
          %208 = sbr.rel (%p206) target = $region28
        $region27: #{tpu_custom_call.1} parent=15 // pred_region
          %p209 = scmp.lt.s32.totalorder %s25, 1
          %s210 = scalar_select %p209, %s25, 1
          %p211 = scmp.lt.s32.totalorder %s26, 0
          %s212 = scalar_select %p211, %s26, 0
          %s213 = sadd.s32 %s212, %s210
          %s214 = scalar_lea.vmem %s2, %s213
        $region28: #{tpu_custom_call.1} parent=15 // pred_fallthru
          _
      $region16: #{tpu_custom_call.1} parent=5 // pred_fallthru
        _
      %p215 = scmp.le.s32.totalorder 1, %s18
      %p216 = scmp.lt.s32.totalorder %s18, 3
      %p217 = pnand %p215, %p216
      %p218 = pneg %p217
      // Predicated region
      $region29: #{tpu_custom_call.1} parent=5 // pred_check
        _
      $region30: #{tpu_custom_call.1} parent=5 // pred_check_branch
        %220 = sbr.rel (%p217) target = $region32
      $region31: #{tpu_custom_call.1} parent=5 // pred_region
        %s221 = ssub.s32 %s18, 1
        %s222 = sand.u32 %s52, 1
        %s223 = scalar_lea.sflag [#allocation5], %s222
        %s224 = sand.u32 %s52, 1
        %s225 = smul.addr %s224, 8
        %s226 = scalar_lea.vmem [#allocation4], %s225
        // Predicated region
        $region33: #{tpu_custom_call.1} parent=31 // pred_check
          %p227 = pneg %p65
        $region34: #{tpu_custom_call.1} parent=31 // pred_check_branch
          %229 = sbr.rel (%p227) target = $region36
        $region35: #{tpu_custom_call.1} parent=31 // pred_region
          %230 = dma.done %s223, 128
        $region36: #{tpu_custom_call.1} parent=31 // pred_fallthru
          _
        %s231 = sand.u32 %s80, 1
        %s232 = scalar_lea.sflag [#allocation8], %s231
        %s233 = sand.u32 %s80, 1
        %s234 = smul.addr %s233, 8
        %s235 = scalar_lea.vmem [#allocation7], %s234
        // Predicated region
        $region37: #{tpu_custom_call.1} parent=31 // pred_check
          %p236 = pneg %p93
        $region38: #{tpu_custom_call.1} parent=31 // pred_check_branch
          %238 = sbr.rel (%p236) target = $region40
        $region39: #{tpu_custom_call.1} parent=31 // pred_region
          %239 = dma.done %s232, 128
        $region40: #{tpu_custom_call.1} parent=31 // pred_fallthru
          _
        %s240 = sand.u32 %s52, 1
        %s241 = scalar_lea.sflag [#allocation5], %s240
        %s242 = sand.u32 %s52, 1
        %s243 = smul.addr %s242, 8
        %s244 = scalar_lea.vmem [#allocation4], %s243
        %p245 = pneg %p65
        %p246 = pneg %p62
        %s247 = sand.u32 %s80, 1
        %s248 = scalar_lea.sflag [#allocation8], %s247
        %s249 = sand.u32 %s80, 1
        %s250 = smul.addr %s249, 8
        %s251 = scalar_lea.vmem [#allocation7], %s250
        %p252 = pneg %p93
        %p253 = pneg %p90
        %p254 = scmp.lt.s32.totalorder %s28, 1
        %s255 = scalar_select %p254, %s28, 1
        %p256 = scmp.lt.s32.totalorder %s29, 0
        %s257 = scalar_select %p256, %s29, 0
        %s258 = sadd.s32 %s257, %s255
        %s259 = scalar_lea.vmem %s2, %s258
        %p260 = pneg %p121
        %p261 = pneg %p118
        %p262 = pneg %p149
        %p263 = pneg %p146
        %s264 = sand.u32 %s136, 1
        %s265 = scalar_lea.sflag [#allocation6], %s264
        %s266 = sand.u32 %s136, 1
        %s267 = scalar_lea.vmem [#allocation9], %s266
        %p268 = scmp.lt.s32.totalorder %s28, 1
        %s269 = scalar_select %p268, %s28, 1
        %p270 = scmp.lt.s32.totalorder %s29, 0
        %s271 = scalar_select %p270, %s29, 0
        %s272 = sadd.s32 %s271, %s269
        %s273 = scalar_lea.vmem %s2, %s272
        %p274 = scmp.eq.s32.totalorder %s30, 0
        // Predicated region
        $region41: #{tpu_custom_call.1} parent=31 // pred_check
          %p275 = pneg %p274
        $region42: #{tpu_custom_call.1} parent=31 // pred_check_branch
          %277 = sbr.rel (%p275) target = $region44
        $region43: #{tpu_custom_call.1} parent=31 // pred_region
          %278 = vst [vmem:[#allocation2] sm:$0xff] 0.0
          %279 = vst [vmem:[#allocation3] sm:$0xff] 0.0
        $region44: #{tpu_custom_call.1} parent=31 // pred_fallthru
          _
        %v280 = vld [vmem:[%s226] sm:$0xff]
        %v281 = vld [vmem:[%s235] sm:$0xff]
        %283 = vset.pattern.permute.xlu0 0
        %284 = vperm.xlu0 %283, %v280
        %v285 = vpop.permute.xlu0 %284
        %v287 = vlaneseq
        %v288 = vshrl.u32 %v287, 7
        %v289 = vsub.s32 0, %v288
        %v290 = vrot.slane %v281, %v289
        %v291 = vmul.f32 %v285, %v290
        %292 = vset.pattern.permute.xlu0 1
        %293 = vperm.xlu0 %292, %v280
        %v294 = vpop.permute.xlu0 %293
        %v296 = vlaneseq
        %v297 = vshrl.u32 %v296, 7
        %v298 = vsub.s32 1, %v297
        %v299 = vrot.slane %v281, %v298
        %v300 = vmul.f32 %v294, %v299
        %v301 = vadd.f32 %v291, %v300
        %302 = vset.pattern.permute.xlu0 2
        %303 = vperm.xlu0 %302, %v280
        %v304 = vpop.permute.xlu0 %303
        %v306 = vlaneseq
        %v307 = vshrl.u32 %v306, 7
        %v308 = vsub.s32 2, %v307
        %v309 = vrot.slane %v281, %v308
        %v310 = vmul.f32 %v304, %v309
        %v311 = vadd.f32 %v301, %v310
        %v312 = vadd.f32 %v311, 0.5
        %v313 = vfloor.f32 %v312
        %v314 = vsub.f32 %v311, %v313
        %v315 = vmul.f32 %v314, 4.0
        %v316 = vadd.f32 %v315, 0.5
        %v317 = vfloor.f32 %v316
        %v318 = vmul.f32 %v317, 0.25
        %v319 = vsub.f32 %v314, %v318
        %v320 = vmul.f32 %v319, 6.2831855
        %v321 = vmul.f32 %v320, %v320
        %v322 = vmul.f32 %v321, 2.4801588e-05
        %v323 = vadd.f32 %v322, -0.0013888889
        %v324 = vmul.f32 %v321, %v323
        %v325 = vadd.f32 %v324, 0.041666668
        %v326 = vmul.f32 %v321, %v325
        %v327 = vadd.f32 %v326, -0.5
        %v328 = vmul.f32 %v321, %v327
        %v329 = vadd.f32 %v328, 1.0
        %v330 = vmul.f32 %v321, 2.7557319e-06
        %v331 = vadd.f32 %v330, -0.0001984127
        %v332 = vmul.f32 %v321, %v331
        %v333 = vadd.f32 %v332, 0.008333334
        %v334 = vmul.f32 %v321, %v333
        %v335 = vadd.f32 %v334, -0.16666667
        %v336 = vmul.f32 %v321, %v335
        %v337 = vadd.f32 %v336, 1.0
        %v338 = vmul.f32 %v320, %v337
        %v339 = vand.u32 2147483647, %v317
        %v340 = vsub.f32 1.0, %v339
        %v341 = vand.u32 2147483647, %v340
        %v342 = vsub.f32 1.0, %v341
        %v343 = vmul.f32 %v317, %v342
        %v344 = vmul.f32 %v329, %v340
        %v345 = vmul.f32 %v338, %v343
        %v346 = vsub.f32 %v344, %v345
        %v347 = vmul.f32 %v338, %v340
        %v348 = vmul.f32 %v329, %v343
        %v349 = vadd.f32 %v347, %v348
        %350 = vset.pattern.permute.xlu0 3
        %351 = vperm.xlu0 %350, %v280
        %v352 = vpop.permute.xlu0 %351
        %v354 = vmul.f32 %v352, %v346
        %v355 = vmul.f32 %v352, %v349
        %v356 = vld [vmem:[#allocation2] sm:$0xff]
        %v357 = vadd.f32 %v354, 0.0
        %v358 = vadd.f32 %v356, %v357
        %359 = vst [vmem:[#allocation2] sm:$0xff] %v358
        %v360 = vld [vmem:[#allocation3] sm:$0xff]
        %v361 = vadd.f32 %v355, 0.0
        %v362 = vadd.f32 %v360, %v361
        %363 = vst [vmem:[#allocation3] sm:$0xff] %v362
        // Predicated region
        $region45: #{tpu_custom_call.1} parent=31 // pred_check
          %p364 = pneg %p274
        $region46: #{tpu_custom_call.1} parent=31 // pred_check_branch
          %366 = sbr.rel (%p364) target = $region48
        $region47: #{tpu_custom_call.1} parent=31 // pred_region
          %v367 = vld [vmem:[#allocation2] sm:$0xff]
          %v368 = vrot.slane %v367, 4
          %v369 = vadd.f32 %v367, %v368
          %v370 = vrot.slane %v369, 2
          %v371 = vadd.f32 %v369, %v370
          %v372 = vrot.slane %v371, 1
          %v373 = vadd.f32 %v371, %v372
          %v374 = vld [vmem:[#allocation3] sm:$0xff]
          %v375 = vrot.slane %v374, 4
          %v376 = vadd.f32 %v374, %v375
          %v377 = vrot.slane %v376, 2
          %v378 = vadd.f32 %v376, %v377
          %v379 = vrot.slane %v378, 1
          %v380 = vadd.f32 %v378, %v379
          %v381 = vld [vmem:[%s273] sm:$0x1]
          %v382 = vmul.f32 %v373, %v373
          %v383 = vmul.f32 %v380, %v380
          %v384 = vadd.f32 %v382, %v383
          %v385 = vmul.f32 %v381, %v384
          %386 = vst [vmem:[%s267] sm:$0x1] %v385
        $region48: #{tpu_custom_call.1} parent=31 // pred_fallthru
          _
        %s387 = sand.u32 %s136, 1
        %s388 = scalar_lea.sflag [#allocation6], %s387
        %s389 = sand.u32 %s136, 1
        %s390 = scalar_lea.vmem [#allocation9], %s389
        // Predicated region
        $region49: #{tpu_custom_call.1} parent=31 // pred_check
          %p391 = pneg %p146
        $region50: #{tpu_custom_call.1} parent=31 // pred_check_branch
          %393 = sbr.rel (%p391) target = $region52
        $region51: #{tpu_custom_call.1} parent=31 // pred_region
          %s395 = ssub.s32 16, 16
          %396 = vsyncadd %s388, %s395
          %s397 = sadd.s32 %s29, %s28
          %s398 = smul.addr %s397, 16
          %s399 = scalar_lea.hbm %s3, %s398
          %s401 = sshll.u32 %s390, 4
          %s402 = int_to_ptr.vmem [resolvable:$true] %s401
          %404 = dma.vmem_to_hbm [thread:$0]  %s402, 16, %s399, %s388
        $region52: #{tpu_custom_call.1} parent=31 // pred_fallthru
          _
      $region32: #{tpu_custom_call.1} parent=5 // pred_fallthru
        _
      %p405 = scmp.le.s32.totalorder 2, %s18
      // Predicated region
      $region53: #{tpu_custom_call.1} parent=5 // pred_check
        %p406 = pneg %p405
      $region54: #{tpu_custom_call.1} parent=5 // pred_check_branch
        %408 = sbr.rel (%p406) target = $region56
      $region55: #{tpu_custom_call.1} parent=5 // pred_region
        %s409 = ssub.s32 %s18, 2
        // Predicated region
        $region57: #{tpu_custom_call.1} parent=55 // pred_check
          %p410 = pneg %p152
        $region58: #{tpu_custom_call.1} parent=55 // pred_check_branch
          %412 = sbr.rel (%p410) target = $region60
        $region59: #{tpu_custom_call.1} parent=55 // pred_region
          %s413 = sand.u32 %s137, 1
          %s414 = scalar_lea.sflag [#allocation6], %s413
          %s415 = sand.u32 %s137, 1
          %s416 = scalar_lea.vmem [#allocation9], %s415
          %417 = dma.done %s414, 16
        $region60: #{tpu_custom_call.1} parent=55 // pred_fallthru
          _
      $region56: #{tpu_custom_call.1} parent=5 // pred_fallthru
        _
    $region6: #{tpu_custom_call.1} parent=1 // loop_footer
      %s22 = sadd.s32 1, %s18
    $region7: #{tpu_custom_call.1} parent=1 // loop_footer_branch
      %17 = sbr.rel target = $region3
    $region8: #{tpu_custom_call.1} parent=1 // loop_exit
      _
    %418 = vsyncpa [#allocation5], 1
    %s419 = scalar_lea.sflag [#allocation5], 1
    %420 = vsyncpa %s419, 1
    %421 = vsyncpa [#allocation8], 1
    %s422 = scalar_lea.sflag [#allocation8], 1
    %423 = vsyncpa %s422, 1
    %424 = vsyncpa [#allocation6], 1
    %s425 = scalar_lea.sflag [#allocation6], 1
    %426 = vsyncpa %s425, 1

</llo_original>
